<compile_context>
chip_gen: v5e
topology: v5e:2x2
jax: 0.10.0
libtpu: 0.0.40
codegen_flags: <defaults>
</compile_context>

<pallas_src>
import math

import jax
import jax.numpy as jnp
from jax.experimental import pallas as pl
from jax.experimental.pallas import tpu as pltpu


# ----------------------------- Pallas kernel --------------------------------

def make_mha_kernel(b_blk, t_q, t_kv, d, n_heads, has_out, compute_dtype):
    d_head = d // n_heads

    def kernel(*refs):
        if has_out:
            (xq_ref, xkv_ref,
             wq_ref, bq_ref, wk_ref, bk_ref, wv_ref, bv_ref,
             wo_ref, bo_ref, o_ref) = refs
        else:
            (xq_ref, xkv_ref,
             wq_ref, bq_ref, wk_ref, bk_ref, wv_ref, bv_ref,
             o_ref) = refs

        cdt = compute_dtype

        # Fold batch into the matmul M dimension so projections fill
        # sublanes / MXU pushes even at tiny T.  Cast activations once.
        xq2 = xq_ref[...].reshape(b_blk * t_q, d).astype(cdt)
        xkv2 = xkv_ref[...].reshape(b_blk * t_kv, d).astype(cdt)

        def proj(x2, w_ref, b_ref):
            # bf16 operands (weights pre-cast in HBM), f32 accumulation,
            # f32 bias add.  1/sqrt(d_head) is pre-folded into wq/bq.
            return (jnp.dot(x2, w_ref[...], preferred_element_type=jnp.float32)
                    + b_ref[...])

        q = proj(xq2, wq_ref, bq_ref).reshape(b_blk, t_q, d)
        k = proj(xkv2, wk_ref, bk_ref).reshape(b_blk, t_kv, d)
        v = proj(xkv2, wv_ref, bv_ref).reshape(b_blk, t_kv, d)

        if has_out:
            acc = jnp.zeros((b_blk * t_q, d), jnp.float32)
        x3 = None

        for h in range(n_heads):                       # static, small head loop
            sl = slice(h * d_head, (h + 1) * d_head)
            qh = q[:, :, sl].astype(cdt)               # (B, Tq, dh)
            kh = k[:, :, sl].astype(cdt)               # (B, Tk, dh)
            vh = v[:, :, sl].astype(cdt)               # (B, Tk, dh)

            # scores: contract last axes of q and k, batch over dim 0
            # (no materialized k transpose); scale already folded into W_q.
            s = jax.lax.dot_general(
                qh, kh, (((2,), (2,)), ((0,), (0,))),
                preferred_element_type=jnp.float32)    # (B, Tq, Tk)

            # numerically-stable softmax in f32; divide via EUP reciprocal.
            s = s - jnp.max(s, axis=-1, keepdims=True)
            p = jnp.exp(s)
            denom = jnp.sum(p, axis=-1, keepdims=True)
            attn = p * pl.reciprocal(denom, approx=True)

            oh = jax.lax.dot_general(
                attn.astype(cdt), vh, (((2,), (1,)), ((0,), (0,))),
                preferred_element_type=jnp.float32)    # (B, Tq, dh)

            if has_out:
                # Accumulate W_out per head: sublane (row) slice of wo,
                # no lane-axis concat of head outputs.
                acc = acc + jnp.dot(
                    oh.reshape(b_blk * t_q, d_head).astype(cdt),
                    wo_ref[sl, :], preferred_element_type=jnp.float32)
            else:
                x3 = oh                                 # n_heads == 1

        if has_out:
            x3 = (acc + bo_ref[...]).reshape(b_blk, t_q, d)

        # Lane-dense output slab (block_b, Tq*D): pack the Tq chunks along the
        # lane axis so the writeback is a dense (>=128-lane) store.
        slab = jnp.concatenate([x3[:, t:t + 1, :] for t in range(t_q)],
                               axis=-1)                 # (B, 1, Tq*D)
        o_ref[...] = slab.reshape(b_blk, t_q * d).astype(o_ref.dtype)

    return kernel


# ------------------------------ wrapper --------------------------------------

def _pick_block_b(B):
    # Prefer >=2 grid steps (v7x has 2 TensorCores) with sublane-aligned
    # blocks; small batches fall back to a single full-batch block.
    for cand in (64, 32, 16, 8):
        if B % cand == 0 and B // cand >= 2:
            return cand
    return B


def _prep_params(params, d, n_heads, compute_dtype):
    """Fold 1/sqrt(d_head) into W_q/b_q and pre-cast weights to bf16."""
    scale = 1.0 / math.sqrt(d // n_heads)
    prepped = {
        'wq': (params['wq'] * scale).astype(compute_dtype),
        'bq': (params['bq'] * scale).astype(jnp.float32),
        'wk': params['wk'].astype(compute_dtype),
        'bk': params['bk'].astype(jnp.float32),
        'wv': params['wv'].astype(compute_dtype),
        'bv': params['bv'].astype(jnp.float32),
    }
    if 'wo' in params:
        prepped['wo'] = params['wo'].astype(compute_dtype)
        prepped['bo'] = params['bo'].astype(jnp.float32)
    return prepped


def multihead_attention(x_q, x_kv, params, n_heads, *, block_b=None,
                        compute_dtype=jnp.bfloat16):
    """x_q: (B, Tq, D), x_kv: (B, Tkv, D) -> (B, Tq, D). Eval-mode forward."""
    B, t_q, d = x_q.shape
    Bk, t_kv, dk = x_kv.shape
    assert B == Bk and d == dk and d % n_heads == 0
    has_out = 'wo' in params

    if block_b is None:
        block_b = _pick_block_b(B)
    assert B % block_b == 0
    # Lane-dense output block needs sublane-aligned (or full-batch) blocks.
    assert block_b == B or block_b % 8 == 0

    prepped = _prep_params(params, d, n_heads, compute_dtype)
    kernel = make_mha_kernel(block_b, t_q, t_kv, d, n_heads, has_out,
                             compute_dtype)

    in_specs = [
        pl.BlockSpec((block_b, t_q, d), lambda i: (i, 0, 0)),
        pl.BlockSpec((block_b, t_kv, d), lambda i: (i, 0, 0)),
    ]
    args = [x_q, x_kv]
    pnames = ['wq', 'bq', 'wk', 'bk', 'wv', 'bv'] + (['wo', 'bo'] if has_out else [])
    for name in pnames:
        p = prepped[name]
        # Weights constant across the batch grid (index_map always 0s).
        in_specs.append(pl.BlockSpec(p.shape, lambda i, _r=p.ndim: (0,) * _r))
        args.append(p)

    # Explicit VMEM budget (double-buffered activation blocks + weights), with
    # generous headroom, capped at v7x's 64 MiB physical VMEM.
    def _nbytes(shape, dtype):
        return math.prod(shape) * jnp.dtype(dtype).itemsize

    est = 2 * (_nbytes((block_b, t_q, d), x_q.dtype)
               + _nbytes((block_b, t_kv, d), x_kv.dtype)
               + _nbytes((block_b, t_q * d), jnp.float32))
    est += 2 * sum(int(a.size) * a.dtype.itemsize for a in args[2:])
    vmem_limit = int(min(64 * 1024 * 1024, max(32 * 1024 * 1024, 8 * est)))

    out = pl.pallas_call(
        kernel,
        out_shape=jax.ShapeDtypeStruct((B, t_q * d), jnp.float32),
        grid=(B // block_b,),
        in_specs=in_specs,
        out_specs=pl.BlockSpec((block_b, t_q * d), lambda i: (i, 0)),
        compiler_params=pltpu.CompilerParams(
            dimension_semantics=("parallel",),
            vmem_limit_bytes=vmem_limit),
    )(*args)
    # Free reshape back: slab row b = [t0: d vals, t1: d vals, ...].
    return out.reshape(B, t_q, d)


# ----------------------------- param init -----------------------------------

def init_mha_params(key, d, n_heads):
    """Linear weights stored as (in, out); biases as (1, out). f32 master copy."""
    ks = jax.random.split(key, 8)
    bound = 1.0 / math.sqrt(d)

    def lin(kw, kb):
        w = jax.random.uniform(kw, (d, d), jnp.float32, -bound, bound)
        b = jax.random.uniform(kb, (1, d), jnp.float32, -bound, bound)
        return w, b

    wq, bq = lin(ks[0], ks[1])
    wk, bk = lin(ks[2], ks[3])
    wv, bv = lin(ks[4], ks[5])
    p = dict(wq=wq, bq=bq, wk=wk, bk=bk, wv=wv, bv=bv)
    if n_heads > 1:
        wo, bo = lin(ks[6], ks[7])
        p['wo'] = wo
        p['bo'] = bo
    return p


# ---------------------- pure-JAX reference (for checking) -------------------

def mha_ref(x_q, x_kv, p, n_heads):
    q = x_q @ p['wq'] + p['bq']
    k = x_kv @ p['wk'] + p['bk']
    v = x_kv @ p['wv'] + p['bv']
    B, t_q, d = q.shape
    d_head = d // n_heads

    def reshape_heads(t):
        Bt, Tt, _ = t.shape
        return (t.reshape(Bt, Tt, n_heads, d_head)
                 .transpose(0, 2, 1, 3)
                 .reshape(Bt * n_heads, Tt, d_head))

    qh, kh, vh = reshape_heads(q), reshape_heads(k), reshape_heads(v)
    a = jnp.einsum('bqd,bkd->bqk', qh, kh) / math.sqrt(d_head)
    attn = jax.nn.softmax(a, axis=-1)
    x = jnp.einsum('bqk,bkd->bqd', attn, vh)
    x = (x.reshape(B, n_heads, t_q, d_head)
          .transpose(0, 2, 1, 3)
          .reshape(B, t_q, d))
    if 'wo' in p:
        x = x @ p['wo'] + p['bo']
    return x


# --------------------------------- main --------------------------------------

if __name__ == "__main__":
    key = jax.random.PRNGKey(0)
    B, T, D = 2, 8, 32
    k1, k2, k3, k4, k5, k6 = jax.random.split(key, 6)

    # Case 1: multi-head (n_heads=4, exercises W_out), self-attention shapes.
    n_heads = 4
    params4 = init_mha_params(k1, D, n_heads)
    x_q = jax.random.normal(k2, (B, T, D), jnp.float32)
    x_kv = jax.random.normal(k3, (B, T, D), jnp.float32)

    out4 = multihead_attention(x_q, x_kv, params4, n_heads)
    out4 = jax.block_until_ready(out4)
    with jax.default_matmul_precision("float32"):
        ref4 = mha_ref(x_q, x_kv, params4, n_heads)
    assert out4.shape == (B, T, D)
    assert jnp.allclose(out4, ref4, rtol=2e-2, atol=2e-2), \
        float(jnp.max(jnp.abs(out4 - ref4)))

    # Case 2: single-head (no W_out), cross-attention with Tq != Tkv.
    n_heads1 = 1
    T_kv = 16
    params1 = init_mha_params(k4, D, n_heads1)
    x_q1 = jax.random.normal(k5, (B, T, D), jnp.float32)
    x_kv1 = jax.random.normal(k6, (B, T_kv, D), jnp.float32)

    out1 = multihead_attention(x_q1, x_kv1, params1, n_heads1)
    out1 = jax.block_until_ready(out1)
    with jax.default_matmul_precision("float32"):
        ref1 = mha_ref(x_q1, x_kv1, params1, n_heads1)
    assert out1.shape == (B, T, D)
    assert jnp.allclose(out1, ref1, rtol=2e-2, atol=2e-2), \
        float(jnp.max(jnp.abs(out1 - ref1)))

    print("KERNEL_OK")
</pallas_src>

<mosaic_0001>
module attributes {stable_mosaic.version = 11 : i64} {
  func.func @kernel(%arg0: i32, %arg1: memref<2x8x32xf32, #tpu.memory_space<vmem>>, %arg2: memref<2x8x32xf32, #tpu.memory_space<vmem>>, %arg3: memref<32x32xbf16, #tpu.memory_space<vmem>>, %arg4: memref<1x32xf32, #tpu.memory_space<vmem>>, %arg5: memref<32x32xbf16, #tpu.memory_space<vmem>>, %arg6: memref<1x32xf32, #tpu.memory_space<vmem>>, %arg7: memref<32x32xbf16, #tpu.memory_space<vmem>>, %arg8: memref<1x32xf32, #tpu.memory_space<vmem>>, %arg9: memref<32x32xbf16, #tpu.memory_space<vmem>>, %arg10: memref<1x32xf32, #tpu.memory_space<vmem>>, %arg11: memref<2x256xf32, #tpu.memory_space<vmem>>) attributes {dimension_semantics = [#tpu.dimension_semantics<parallel>], iteration_bounds = array<i64: 1>, scalar_prefetch = 0 : i64, scratch_operands = 0 : i64, tpu.core_type = #tpu.core_type<tc>, window_params = [{transform_indices = @transform_0, window_bounds = array<i64: 2, 8, 32>}, {transform_indices = @transform_1, window_bounds = array<i64: 2, 8, 32>}, {pipeline_mode = #tpu.pipeline_mode<synchronous>, transform_indices = @transform_2, window_bounds = array<i64: 32, 32>}, {pipeline_mode = #tpu.pipeline_mode<synchronous>, transform_indices = @transform_3, window_bounds = array<i64: 1, 32>}, {pipeline_mode = #tpu.pipeline_mode<synchronous>, transform_indices = @transform_4, window_bounds = array<i64: 32, 32>}, {pipeline_mode = #tpu.pipeline_mode<synchronous>, transform_indices = @transform_5, window_bounds = array<i64: 1, 32>}, {pipeline_mode = #tpu.pipeline_mode<synchronous>, transform_indices = @transform_6, window_bounds = array<i64: 32, 32>}, {pipeline_mode = #tpu.pipeline_mode<synchronous>, transform_indices = @transform_7, window_bounds = array<i64: 1, 32>}, {pipeline_mode = #tpu.pipeline_mode<synchronous>, transform_indices = @transform_8, window_bounds = array<i64: 32, 32>}, {pipeline_mode = #tpu.pipeline_mode<synchronous>, transform_indices = @transform_9, window_bounds = array<i64: 1, 32>}, {transform_indices = @transform_10, window_bounds = array<i64: 2, 256>}]} {
    %c0 = arith.constant 0 : index
    %c0_0 = arith.constant 0 : index
    %c0_1 = arith.constant 0 : index
    %0 = vector.load %arg1[%c0, %c0_0, %c0_1] : memref<2x8x32xf32, #tpu.memory_space<vmem>>, vector<2x8x32xf32>
    %1 = vector.shape_cast %0 : vector<2x8x32xf32> to vector<16x32xf32>
    %2 = arith.truncf %1 : vector<16x32xf32> to vector<16x32xbf16>
    %c0_2 = arith.constant 0 : index
    %c0_3 = arith.constant 0 : index
    %c0_4 = arith.constant 0 : index
    %3 = vector.load %arg2[%c0_2, %c0_3, %c0_4] : memref<2x8x32xf32, #tpu.memory_space<vmem>>, vector<2x8x32xf32>
    %4 = vector.shape_cast %3 : vector<2x8x32xf32> to vector<16x32xf32>
    %5 = arith.truncf %4 : vector<16x32xf32> to vector<16x32xbf16>
    %c0_5 = arith.constant 0 : index
    %c0_6 = arith.constant 0 : index
    %6 = vector.load %arg3[%c0_5, %c0_6] : memref<32x32xbf16, #tpu.memory_space<vmem>>, vector<32x32xbf16>
    %cst = arith.constant dense<0.000000e+00> : vector<16x32xf32>
    %7 = tpu.matmul %2, %6, %cst {dimension_numbers = #tpu.dot_dimension_numbers<[1], [0], [0], [1], [0, 0, 1, 1], [], []>} : vector<16x32xbf16>, vector<32x32xbf16>, vector<16x32xf32> -> vector<16x32xf32>
    %c0_7 = arith.constant 0 : index
    %c0_8 = arith.constant 0 : index
    %8 = vector.load %arg4[%c0_7, %c0_8] : memref<1x32xf32, #tpu.memory_space<vmem>>, vector<1x32xf32>
    %9 = vector.broadcast %8 : vector<1x32xf32> to vector<16x32xf32>
    %10 = arith.addf %7, %9 : vector<16x32xf32>
    %11 = vector.shape_cast %10 : vector<16x32xf32> to vector<2x8x32xf32>
    %c0_9 = arith.constant 0 : index
    %c0_10 = arith.constant 0 : index
    %12 = vector.load %arg5[%c0_9, %c0_10] : memref<32x32xbf16, #tpu.memory_space<vmem>>, vector<32x32xbf16>
    %cst_11 = arith.constant dense<0.000000e+00> : vector<16x32xf32>
    %13 = tpu.matmul %5, %12, %cst_11 {dimension_numbers = #tpu.dot_dimension_numbers<[1], [0], [0], [1], [0, 0, 1, 1], [], []>} : vector<16x32xbf16>, vector<32x32xbf16>, vector<16x32xf32> -> vector<16x32xf32>
    %c0_12 = arith.constant 0 : index
    %c0_13 = arith.constant 0 : index
    %14 = vector.load %arg6[%c0_12, %c0_13] : memref<1x32xf32, #tpu.memory_space<vmem>>, vector<1x32xf32>
    %15 = vector.broadcast %14 : vector<1x32xf32> to vector<16x32xf32>
    %16 = arith.addf %13, %15 : vector<16x32xf32>
    %17 = vector.shape_cast %16 : vector<16x32xf32> to vector<2x8x32xf32>
    %c0_14 = arith.constant 0 : index
    %c0_15 = arith.constant 0 : index
    %18 = vector.load %arg7[%c0_14, %c0_15] : memref<32x32xbf16, #tpu.memory_space<vmem>>, vector<32x32xbf16>
    %cst_16 = arith.constant dense<0.000000e+00> : vector<16x32xf32>
    %19 = tpu.matmul %5, %18, %cst_16 {dimension_numbers = #tpu.dot_dimension_numbers<[1], [0], [0], [1], [0, 0, 1, 1], [], []>} : vector<16x32xbf16>, vector<32x32xbf16>, vector<16x32xf32> -> vector<16x32xf32>
    %c0_17 = arith.constant 0 : index
    %c0_18 = arith.constant 0 : index
    %20 = vector.load %arg8[%c0_17, %c0_18] : memref<1x32xf32, #tpu.memory_space<vmem>>, vector<1x32xf32>
    %21 = vector.broadcast %20 : vector<1x32xf32> to vector<16x32xf32>
    %22 = arith.addf %19, %21 : vector<16x32xf32>
    %23 = vector.shape_cast %22 : vector<16x32xf32> to vector<2x8x32xf32>
    %cst_19 = arith.constant 0.000000e+00 : f32
    %24 = vector.broadcast %cst_19 : f32 to vector<16x32xf32>
    %25 = vector.extract_strided_slice %11 {offsets = [0, 0, 0], sizes = [2, 8, 8], strides = [1, 1, 1]} : vector<2x8x32xf32> to vector<2x8x8xf32>
    %26 = arith.truncf %25 : vector<2x8x8xf32> to vector<2x8x8xbf16>
    %27 = vector.extract_strided_slice %17 {offsets = [0, 0, 0], sizes = [2, 8, 8], strides = [1, 1, 1]} : vector<2x8x32xf32> to vector<2x8x8xf32>
    %28 = arith.truncf %27 : vector<2x8x8xf32> to vector<2x8x8xbf16>
    %29 = vector.extract_strided_slice %23 {offsets = [0, 0, 0], sizes = [2, 8, 8], strides = [1, 1, 1]} : vector<2x8x32xf32> to vector<2x8x8xf32>
    %30 = arith.truncf %29 : vector<2x8x8xf32> to vector<2x8x8xbf16>
    %cst_20 = arith.constant dense<0.000000e+00> : vector<2x8x8xf32>
    %31 = tpu.matmul %26, %28, %cst_20 {dimension_numbers = #tpu.dot_dimension_numbers<[2], [2], [1], [1], [0, 0, 0, 1, 1, 1], [0], [0]>} : vector<2x8x8xbf16>, vector<2x8x8xbf16>, vector<2x8x8xf32> -> vector<2x8x8xf32>
    %cst_21 = arith.constant dense<0xFF800000> : vector<2x8xf32>
    %32 = vector.multi_reduction <maximumf>, %31, %cst_21 [2] : vector<2x8x8xf32> to vector<2x8xf32>
    %33 = vector.shape_cast %32 : vector<2x8xf32> to vector<2x8x1xf32>
    %34 = vector.broadcast %33 : vector<2x8x1xf32> to vector<2x8x8xf32>
    %35 = arith.subf %31, %34 : vector<2x8x8xf32>
    %36 = math.exp %35 : vector<2x8x8xf32>
    %cst_22 = arith.constant dense<0.000000e+00> : vector<2x8xf32>
    %37 = vector.multi_reduction <add>, %36, %cst_22 [2] : vector<2x8x8xf32> to vector<2x8xf32>
    %38 = vector.shape_cast %37 : vector<2x8xf32> to vector<2x8x1xf32>
    %39 = tpu.reciprocal %38 {approx = true} : vector<2x8x1xf32> -> vector<2x8x1xf32>
    %40 = vector.broadcast %39 : vector<2x8x1xf32> to vector<2x8x8xf32>
    %41 = arith.mulf %36, %40 : vector<2x8x8xf32>
    %42 = arith.truncf %41 : vector<2x8x8xf32> to vector<2x8x8xbf16>
    %cst_23 = arith.constant dense<0.000000e+00> : vector<2x8x8xf32>
    %43 = tpu.matmul %42, %30, %cst_23 {dimension_numbers = #tpu.dot_dimension_numbers<[2], [1], [1], [2], [0, 0, 0, 1, 1, 2], [0], [0]>} : vector<2x8x8xbf16>, vector<2x8x8xbf16>, vector<2x8x8xf32> -> vector<2x8x8xf32>
    %44 = vector.shape_cast %43 : vector<2x8x8xf32> to vector<16x8xf32>
    %45 = arith.truncf %44 : vector<16x8xf32> to vector<16x8xbf16>
    %c0_24 = arith.constant 0 : index
    %c0_25 = arith.constant 0 : index
    %46 = vector.load %arg9[%c0_24, %c0_25] : memref<32x32xbf16, #tpu.memory_space<vmem>>, vector<8x32xbf16>
    %cst_26 = arith.constant dense<0.000000e+00> : vector<16x32xf32>
    %47 = tpu.matmul %45, %46, %cst_26 {dimension_numbers = #tpu.dot_dimension_numbers<[1], [0], [0], [1], [0, 0, 1, 1], [], []>} : vector<16x8xbf16>, vector<8x32xbf16>, vector<16x32xf32> -> vector<16x32xf32>
    %48 = arith.addf %24, %47 : vector<16x32xf32>
    %49 = vector.extract_strided_slice %11 {offsets = [0, 0, 8], sizes = [2, 8, 8], strides = [1, 1, 1]} : vector<2x8x32xf32> to vector<2x8x8xf32>
    %50 = arith.truncf %49 : vector<2x8x8xf32> to vector<2x8x8xbf16>
    %51 = vector.extract_strided_slice %17 {offsets = [0, 0, 8], sizes = [2, 8, 8], strides = [1, 1, 1]} : vector<2x8x32xf32> to vector<2x8x8xf32>
    %52 = arith.truncf %51 : vector<2x8x8xf32> to vector<2x8x8xbf16>
    %53 = vector.extract_strided_slice %23 {offsets = [0, 0, 8], sizes = [2, 8, 8], strides = [1, 1, 1]} : vector<2x8x32xf32> to vector<2x8x8xf32>
    %54 = arith.truncf %53 : vector<2x8x8xf32> to vector<2x8x8xbf16>
    %cst_27 = arith.constant dense<0.000000e+00> : vector<2x8x8xf32>
    %55 = tpu.matmul %50, %52, %cst_27 {dimension_numbers = #tpu.dot_dimension_numbers<[2], [2], [1], [1], [0, 0, 0, 1, 1, 1], [0], [0]>} : vector<2x8x8xbf16>, vector<2x8x8xbf16>, vector<2x8x8xf32> -> vector<2x8x8xf32>
    %cst_28 = arith.constant dense<0xFF800000> : vector<2x8xf32>
    %56 = vector.multi_reduction <maximumf>, %55, %cst_28 [2] : vector<2x8x8xf32> to vector<2x8xf32>
    %57 = vector.shape_cast %56 : vector<2x8xf32> to vector<2x8x1xf32>
    %58 = vector.broadcast %57 : vector<2x8x1xf32> to vector<2x8x8xf32>
    %59 = arith.subf %55, %58 : vector<2x8x8xf32>
    %60 = math.exp %59 : vector<2x8x8xf32>
    %cst_29 = arith.constant dense<0.000000e+00> : vector<2x8xf32>
    %61 = vector.multi_reduction <add>, %60, %cst_29 [2] : vector<2x8x8xf32> to vector<2x8xf32>
    %62 = vector.shape_cast %61 : vector<2x8xf32> to vector<2x8x1xf32>
    %63 = tpu.reciprocal %62 {approx = true} : vector<2x8x1xf32> -> vector<2x8x1xf32>
    %64 = vector.broadcast %63 : vector<2x8x1xf32> to vector<2x8x8xf32>
    %65 = arith.mulf %60, %64 : vector<2x8x8xf32>
    %66 = arith.truncf %65 : vector<2x8x8xf32> to vector<2x8x8xbf16>
    %cst_30 = arith.constant dense<0.000000e+00> : vector<2x8x8xf32>
    %67 = tpu.matmul %66, %54, %cst_30 {dimension_numbers = #tpu.dot_dimension_numbers<[2], [1], [1], [2], [0, 0, 0, 1, 1, 2], [0], [0]>} : vector<2x8x8xbf16>, vector<2x8x8xbf16>, vector<2x8x8xf32> -> vector<2x8x8xf32>
    %68 = vector.shape_cast %67 : vector<2x8x8xf32> to vector<16x8xf32>
    %69 = arith.truncf %68 : vector<16x8xf32> to vector<16x8xbf16>
    %c8 = arith.constant 8 : index
    %c0_31 = arith.constant 0 : index
    %70 = vector.load %arg9[%c8, %c0_31] : memref<32x32xbf16, #tpu.memory_space<vmem>>, vector<8x32xbf16>
    %cst_32 = arith.constant dense<0.000000e+00> : vector<16x32xf32>
    %71 = tpu.matmul %69, %70, %cst_32 {dimension_numbers = #tpu.dot_dimension_numbers<[1], [0], [0], [1], [0, 0, 1, 1], [], []>} : vector<16x8xbf16>, vector<8x32xbf16>, vector<16x32xf32> -> vector<16x32xf32>
    %72 = arith.addf %48, %71 : vector<16x32xf32>
    %73 = vector.extract_strided_slice %11 {offsets = [0, 0, 16], sizes = [2, 8, 8], strides = [1, 1, 1]} : vector<2x8x32xf32> to vector<2x8x8xf32>
    %74 = arith.truncf %73 : vector<2x8x8xf32> to vector<2x8x8xbf16>
    %75 = vector.extract_strided_slice %17 {offsets = [0, 0, 16], sizes = [2, 8, 8], strides = [1, 1, 1]} : vector<2x8x32xf32> to vector<2x8x8xf32>
    %76 = arith.truncf %75 : vector<2x8x8xf32> to vector<2x8x8xbf16>
    %77 = vector.extract_strided_slice %23 {offsets = [0, 0, 16], sizes = [2, 8, 8], strides = [1, 1, 1]} : vector<2x8x32xf32> to vector<2x8x8xf32>
    %78 = arith.truncf %77 : vector<2x8x8xf32> to vector<2x8x8xbf16>
    %cst_33 = arith.constant dense<0.000000e+00> : vector<2x8x8xf32>
    %79 = tpu.matmul %74, %76, %cst_33 {dimension_numbers = #tpu.dot_dimension_numbers<[2], [2], [1], [1], [0, 0, 0, 1, 1, 1], [0], [0]>} : vector<2x8x8xbf16>, vector<2x8x8xbf16>, vector<2x8x8xf32> -> vector<2x8x8xf32>
    %cst_34 = arith.constant dense<0xFF800000> : vector<2x8xf32>
    %80 = vector.multi_reduction <maximumf>, %79, %cst_34 [2] : vector<2x8x8xf32> to vector<2x8xf32>
    %81 = vector.shape_cast %80 : vector<2x8xf32> to vector<2x8x1xf32>
    %82 = vector.broadcast %81 : vector<2x8x1xf32> to vector<2x8x8xf32>
    %83 = arith.subf %79, %82 : vector<2x8x8xf32>
    %84 = math.exp %83 : vector<2x8x8xf32>
    %cst_35 = arith.constant dense<0.000000e+00> : vector<2x8xf32>
    %85 = vector.multi_reduction <add>, %84, %cst_35 [2] : vector<2x8x8xf32> to vector<2x8xf32>
    %86 = vector.shape_cast %85 : vector<2x8xf32> to vector<2x8x1xf32>
    %87 = tpu.reciprocal %86 {approx = true} : vector<2x8x1xf32> -> vector<2x8x1xf32>
    %88 = vector.broadcast %87 : vector<2x8x1xf32> to vector<2x8x8xf32>
    %89 = arith.mulf %84, %88 : vector<2x8x8xf32>
    %90 = arith.truncf %89 : vector<2x8x8xf32> to vector<2x8x8xbf16>
    %cst_36 = arith.constant dense<0.000000e+00> : vector<2x8x8xf32>
    %91 = tpu.matmul %90, %78, %cst_36 {dimension_numbers = #tpu.dot_dimension_numbers<[2], [1], [1], [2], [0, 0, 0, 1, 1, 2], [0], [0]>} : vector<2x8x8xbf16>, vector<2x8x8xbf16>, vector<2x8x8xf32> -> vector<2x8x8xf32>
    %92 = vector.shape_cast %91 : vector<2x8x8xf32> to vector<16x8xf32>
    %93 = arith.truncf %92 : vector<16x8xf32> to vector<16x8xbf16>
    %c16 = arith.constant 16 : index
    %c0_37 = arith.constant 0 : index
    %94 = vector.load %arg9[%c16, %c0_37] : memref<32x32xbf16, #tpu.memory_space<vmem>>, vector<8x32xbf16>
    %cst_38 = arith.constant dense<0.000000e+00> : vector<16x32xf32>
    %95 = tpu.matmul %93, %94, %cst_38 {dimension_numbers = #tpu.dot_dimension_numbers<[1], [0], [0], [1], [0, 0, 1, 1], [], []>} : vector<16x8xbf16>, vector<8x32xbf16>, vector<16x32xf32> -> vector<16x32xf32>
    %96 = arith.addf %72, %95 : vector<16x32xf32>
    %97 = vector.extract_strided_slice %11 {offsets = [0, 0, 24], sizes = [2, 8, 8], strides = [1, 1, 1]} : vector<2x8x32xf32> to vector<2x8x8xf32>
    %98 = arith.truncf %97 : vector<2x8x8xf32> to vector<2x8x8xbf16>
    %99 = vector.extract_strided_slice %17 {offsets = [0, 0, 24], sizes = [2, 8, 8], strides = [1, 1, 1]} : vector<2x8x32xf32> to vector<2x8x8xf32>
    %100 = arith.truncf %99 : vector<2x8x8xf32> to vector<2x8x8xbf16>
    %101 = vector.extract_strided_slice %23 {offsets = [0, 0, 24], sizes = [2, 8, 8], strides = [1, 1, 1]} : vector<2x8x32xf32> to vector<2x8x8xf32>
    %102 = arith.truncf %101 : vector<2x8x8xf32> to vector<2x8x8xbf16>
    %cst_39 = arith.constant dense<0.000000e+00> : vector<2x8x8xf32>
    %103 = tpu.matmul %98, %100, %cst_39 {dimension_numbers = #tpu.dot_dimension_numbers<[2], [2], [1], [1], [0, 0, 0, 1, 1, 1], [0], [0]>} : vector<2x8x8xbf16>, vector<2x8x8xbf16>, vector<2x8x8xf32> -> vector<2x8x8xf32>
    %cst_40 = arith.constant dense<0xFF800000> : vector<2x8xf32>
    %104 = vector.multi_reduction <maximumf>, %103, %cst_40 [2] : vector<2x8x8xf32> to vector<2x8xf32>
    %105 = vector.shape_cast %104 : vector<2x8xf32> to vector<2x8x1xf32>
    %106 = vector.broadcast %105 : vector<2x8x1xf32> to vector<2x8x8xf32>
    %107 = arith.subf %103, %106 : vector<2x8x8xf32>
    %108 = math.exp %107 : vector<2x8x8xf32>
    %cst_41 = arith.constant dense<0.000000e+00> : vector<2x8xf32>
    %109 = vector.multi_reduction <add>, %108, %cst_41 [2] : vector<2x8x8xf32> to vector<2x8xf32>
    %110 = vector.shape_cast %109 : vector<2x8xf32> to vector<2x8x1xf32>
    %111 = tpu.reciprocal %110 {approx = true} : vector<2x8x1xf32> -> vector<2x8x1xf32>
    %112 = vector.broadcast %111 : vector<2x8x1xf32> to vector<2x8x8xf32>
    %113 = arith.mulf %108, %112 : vector<2x8x8xf32>
    %114 = arith.truncf %113 : vector<2x8x8xf32> to vector<2x8x8xbf16>
    %cst_42 = arith.constant dense<0.000000e+00> : vector<2x8x8xf32>
    %115 = tpu.matmul %114, %102, %cst_42 {dimension_numbers = #tpu.dot_dimension_numbers<[2], [1], [1], [2], [0, 0, 0, 1, 1, 2], [0], [0]>} : vector<2x8x8xbf16>, vector<2x8x8xbf16>, vector<2x8x8xf32> -> vector<2x8x8xf32>
    %116 = vector.shape_cast %115 : vector<2x8x8xf32> to vector<16x8xf32>
    %117 = arith.truncf %116 : vector<16x8xf32> to vector<16x8xbf16>
    %c24 = arith.constant 24 : index
    %c0_43 = arith.constant 0 : index
    %118 = vector.load %arg9[%c24, %c0_43] : memref<32x32xbf16, #tpu.memory_space<vmem>>, vector<8x32xbf16>
    %cst_44 = arith.constant dense<0.000000e+00> : vector<16x32xf32>
    %119 = tpu.matmul %117, %118, %cst_44 {dimension_numbers = #tpu.dot_dimension_numbers<[1], [0], [0], [1], [0, 0, 1, 1], [], []>} : vector<16x8xbf16>, vector<8x32xbf16>, vector<16x32xf32> -> vector<16x32xf32>
    %120 = arith.addf %96, %119 : vector<16x32xf32>
    %c0_45 = arith.constant 0 : index
    %c0_46 = arith.constant 0 : index
    %121 = vector.load %arg10[%c0_45, %c0_46] : memref<1x32xf32, #tpu.memory_space<vmem>>, vector<1x32xf32>
    %122 = vector.broadcast %121 : vector<1x32xf32> to vector<16x32xf32>
    %123 = arith.addf %120, %122 : vector<16x32xf32>
    %124 = vector.shape_cast %123 : vector<16x32xf32> to vector<2x8x32xf32>
    %125 = vector.extract_strided_slice %124 {offsets = [0, 0, 0], sizes = [2, 1, 32], strides = [1, 1, 1]} : vector<2x8x32xf32> to vector<2x1x32xf32>
    %126 = vector.extract_strided_slice %124 {offsets = [0, 1, 0], sizes = [2, 1, 32], strides = [1, 1, 1]} : vector<2x8x32xf32> to vector<2x1x32xf32>
    %127 = vector.extract_strided_slice %124 {offsets = [0, 2, 0], sizes = [2, 1, 32], strides = [1, 1, 1]} : vector<2x8x32xf32> to vector<2x1x32xf32>
    %128 = vector.extract_strided_slice %124 {offsets = [0, 3, 0], sizes = [2, 1, 32], strides = [1, 1, 1]} : vector<2x8x32xf32> to vector<2x1x32xf32>
    %129 = vector.extract_strided_slice %124 {offsets = [0, 4, 0], sizes = [2, 1, 32], strides = [1, 1, 1]} : vector<2x8x32xf32> to vector<2x1x32xf32>
    %130 = vector.extract_strided_slice %124 {offsets = [0, 5, 0], sizes = [2, 1, 32], strides = [1, 1, 1]} : vector<2x8x32xf32> to vector<2x1x32xf32>
    %131 = vector.extract_strided_slice %124 {offsets = [0, 6, 0], sizes = [2, 1, 32], strides = [1, 1, 1]} : vector<2x8x32xf32> to vector<2x1x32xf32>
    %132 = vector.extract_strided_slice %124 {offsets = [0, 7, 0], sizes = [2, 1, 32], strides = [1, 1, 1]} : vector<2x8x32xf32> to vector<2x1x32xf32>
    %133 = tpu.concatenate %125, %126, %127, %128, %129, %130, %131, %132 in 2 : vector<2x1x32xf32>, vector<2x1x32xf32>, vector<2x1x32xf32>, vector<2x1x32xf32>, vector<2x1x32xf32>, vector<2x1x32xf32>, vector<2x1x32xf32>, vector<2x1x32xf32> -> vector<2x1x256xf32>
    %134 = vector.shape_cast %133 : vector<2x1x256xf32> to vector<2x256xf32>
    %c0_47 = arith.constant 0 : index
    %c0_48 = arith.constant 0 : index
    %135 = vector.load %arg11[%c0_47, %c0_48] : memref<2x256xf32, #tpu.memory_space<vmem>>, vector<2x256xf32>
    tpu.vector_store %arg11[%c0_47, %c0_48], %134 {strides = array<i32>} : memref<2x256xf32, #tpu.memory_space<vmem>>, vector<2x256xf32>,
    return
  }
  func.func @transform_0(%arg0: i32) -> (i32, i32, i32) {
    %c0_i32 = arith.constant 0 : i32
    %c0_i32_0 = arith.constant 0 : i32
    %c0_i32_1 = arith.constant 0 : i32
    return %arg0, %c0_i32, %c0_i32_0 : i32, i32, i32
  }
  func.func @transform_1(%arg0: i32) -> (i32, i32, i32) {
    %c0_i32 = arith.constant 0 : i32
    %c0_i32_0 = arith.constant 0 : i32
    %c0_i32_1 = arith.constant 0 : i32
    return %arg0, %c0_i32, %c0_i32_0 : i32, i32, i32
  }
  func.func @transform_2(%arg0: i32) -> (i32, i32) {
    %c0_i32 = arith.constant 0 : i32
    %c0_i32_0 = arith.constant 0 : i32
    %c0_i32_1 = arith.constant 0 : i32
    return %c0_i32, %c0_i32_0 : i32, i32
  }
  func.func @transform_3(%arg0: i32) -> (i32, i32) {
    %c0_i32 = arith.constant 0 : i32
    %c0_i32_0 = arith.constant 0 : i32
    %c0_i32_1 = arith.constant 0 : i32
    return %c0_i32, %c0_i32_0 : i32, i32
  }
  func.func @transform_4(%arg0: i32) -> (i32, i32) {
    %c0_i32 = arith.constant 0 : i32
    %c0_i32_0 = arith.constant 0 : i32
    %c0_i32_1 = arith.constant 0 : i32
    return %c0_i32, %c0_i32_0 : i32, i32
  }
  func.func @transform_5(%arg0: i32) -> (i32, i32) {
    %c0_i32 = arith.constant 0 : i32
    %c0_i32_0 = arith.constant 0 : i32
    %c0_i32_1 = arith.constant 0 : i32
    return %c0_i32, %c0_i32_0 : i32, i32
  }
  func.func @transform_6(%arg0: i32) -> (i32, i32) {
    %c0_i32 = arith.constant 0 : i32
    %c0_i32_0 = arith.constant 0 : i32
    %c0_i32_1 = arith.constant 0 : i32
    return %c0_i32, %c0_i32_0 : i32, i32
  }
  func.func @transform_7(%arg0: i32) -> (i32, i32) {
    %c0_i32 = arith.constant 0 : i32
    %c0_i32_0 = arith.constant 0 : i32
    %c0_i32_1 = arith.constant 0 : i32
    return %c0_i32, %c0_i32_0 : i32, i32
  }
  func.func @transform_8(%arg0: i32) -> (i32, i32) {
    %c0_i32 = arith.constant 0 : i32
    %c0_i32_0 = arith.constant 0 : i32
    %c0_i32_1 = arith.constant 0 : i32
    return %c0_i32, %c0_i32_0 : i32, i32
  }
  func.func @transform_9(%arg0: i32) -> (i32, i32) {
    %c0_i32 = arith.constant 0 : i32
    %c0_i32_0 = arith.constant 0 : i32
    %c0_i32_1 = arith.constant 0 : i32
    return %c0_i32, %c0_i32_0 : i32, i32
  }
  func.func @transform_10(%arg0: i32) -> (i32, i32) {
    %c0_i32 = arith.constant 0 : i32
    %c0_i32_0 = arith.constant 0 : i32
    return %arg0, %c0_i32 : i32, i32
  }
}

</mosaic_0001>

<llo_original>
// kernel: tpu_custom_call.1
$region0: #{tpu_custom_call.1}
  #allocation0 [shape = 'u32[]', space=smem, size = 0x4, offset = 0x4, fixed_abs, tag = 'smem constant byte address 0x4 - core index']
  #allocation1 [shape = 'u32[72,128]{1,0:T(1,128)}', space=vmem, size = 0x9000, scoped, tag = 'internal scratch']
  %s0 = inlined_call_operand.hbm [shape: f32[2,8,32], index: 0, kind: input, shape index: {}]
  %s1 = inlined_call_operand.hbm [shape: f32[2,8,32], index: 1, kind: input, shape index: {}]
  %s2 = inlined_call_operand.hbm [shape: bf16[32,32], index: 2, kind: input, shape index: {}]
  %s3 = inlined_call_operand.vmem [shape: f32[1,32], index: 3, kind: input, shape index: {}]
  %s4 = inlined_call_operand.hbm [shape: bf16[32,32], index: 4, kind: input, shape index: {}]
  %s5 = inlined_call_operand.vmem [shape: f32[1,32], index: 5, kind: input, shape index: {}]
  %s6 = inlined_call_operand.hbm [shape: bf16[32,32], index: 6, kind: input, shape index: {}]
  %s7 = inlined_call_operand.vmem [shape: f32[1,32], index: 7, kind: input, shape index: {}]
  %s8 = inlined_call_operand.hbm [shape: bf16[32,32], index: 8, kind: input, shape index: {}]
  %s9 = inlined_call_operand.vmem [shape: f32[1,32], index: 9, kind: input, shape index: {}]
  %s10 = inlined_call_operand.hbm [shape: f32[2,256], index: 10, kind: output, shape index: {}]
  %s11 = sld [smem:[#allocation0]]
  $region74: #{tpu_custom_call.1} parent=0
    _
  %s13 = ssub.s32 1, %s11
  %s14 = scalar_select 0, %s13, %s11
  $region1: #{tpu_custom_call.1} parent=0
    #allocation2 [shape = 'u8[8192]{0}', space=vmem, size = 0x2000, scoped, tag = 'input window, operand 0, single buffered']
    #allocation3 [shape = 's32[1]{0}', space=sflag, size = 0x4, scoped, tag = 'scoped memory for tpu_custom_call.1']
    #allocation4 [shape = 's32[1]{0}', space=sflag, size = 0x4, scoped, tag = 'scoped memory for tpu_custom_call.1']
    #allocation5 [shape = 'u8[8192]{0}', space=vmem, size = 0x2000, scoped, tag = 'input window, operand 1, single buffered']
    #allocation6 [shape = 's32[1]{0}', space=sflag, size = 0x4, scoped, tag = 'scoped memory for tpu_custom_call.1']
    #allocation7 [shape = 'u8[8192]{0}', space=vmem, size = 0x2000, scoped, tag = 'input window, operand 2, single buffered']
    #allocation8 [shape = 'u8[8192]{0}', space=vmem, size = 0x2000, scoped, tag = 'input window, operand 4, single buffered']
    #allocation9 [shape = 's32[1]{0}', space=sflag, size = 0x4, scoped, tag = 'scoped memory for tpu_custom_call.1']
    #allocation10 [shape = 'u8[8192]{0}', space=vmem, size = 0x2000, scoped, tag = 'input window, operand 6, single buffered']
    #allocation11 [shape = 'u8[8192]{0}', space=vmem, size = 0x2000, scoped, tag = 'input window, operand 8, single buffered']
    #allocation12 [shape = 's32[1]{0}', space=sflag, size = 0x4, scoped, tag = 'scoped memory for tpu_custom_call.1']
    #allocation13 [shape = 'u8[2048]{0}', space=vmem, size = 0x800, scoped, tag = 'output window, operand 0, single buffered']
    %15 = vsyncpa [#allocation3], 0
    %16 = vsyncpa [#allocation6], 0
    %17 = vsyncpa [#allocation9], 0
    %18 = vsyncpa [#allocation12], 0
    %19 = vsyncpa [#allocation4], 0
    // Predicated region
    $region2: #{tpu_custom_call.1} parent=1 // pred_check
      _
    $region3: #{tpu_custom_call.1} parent=1 // pred_check_branch
      %21 = sbr.rel (0) target = $region5
    $region4: #{tpu_custom_call.1} parent=1 // pred_region
      %23 = vsyncadd [#allocation3], 0
      %s24 = sshll.u32 %s0, 4
      %s25 = int_to_ptr.hbm [resolvable:$true] %s24
      %s26 = sshll.u32 [#allocation2], 4
      %s27 = int_to_ptr.vmem [resolvable:$true] %s26
      %32 = dma.hbm_to_vmem [thread:$0]  %s25, 256, %s27, [#allocation3], 128, 128, 8
    $region5: #{tpu_custom_call.1} parent=1 // pred_fallthru
      _
    // Predicated region
    $region6: #{tpu_custom_call.1} parent=1 // pred_check
      _
    $region7: #{tpu_custom_call.1} parent=1 // pred_check_branch
      %34 = sbr.rel (0) target = $region9
    $region8: #{tpu_custom_call.1} parent=1 // pred_region
      %36 = vsyncadd [#allocation6], 0
      %s37 = sshll.u32 %s1, 4
      %s38 = int_to_ptr.hbm [resolvable:$true] %s37
      %s39 = sshll.u32 [#allocation5], 4
      %s40 = int_to_ptr.vmem [resolvable:$true] %s39
      %45 = dma.hbm_to_vmem [thread:$0]  %s38, 256, %s40, [#allocation6], 128, 128, 8
    $region9: #{tpu_custom_call.1} parent=1 // pred_fallthru
      _
    // Predicated region
    $region10: #{tpu_custom_call.1} parent=1 // pred_check
      _
    $region11: #{tpu_custom_call.1} parent=1 // pred_check_branch
      %47 = sbr.rel (0) target = $region13
    $region12: #{tpu_custom_call.1} parent=1 // pred_region
      %49 = vsyncadd [#allocation6], 0
      %s50 = sshll.u32 %s2, 4
      %s51 = int_to_ptr.hbm [resolvable:$true] %s50
      %s52 = sshll.u32 [#allocation7], 4
      %s53 = int_to_ptr.vmem [resolvable:$true] %s52
      %58 = dma.hbm_to_vmem [thread:$0]  %s51, 256, %s53, [#allocation6], 64, 64, 4
    $region13: #{tpu_custom_call.1} parent=1 // pred_fallthru
      _
    // Predicated region
    $region14: #{tpu_custom_call.1} parent=1 // pred_check
      _
    $region15: #{tpu_custom_call.1} parent=1 // pred_check_branch
      %60 = sbr.rel (0) target = $region17
    $region16: #{tpu_custom_call.1} parent=1 // pred_region
      _
    $region17: #{tpu_custom_call.1} parent=1 // pred_fallthru
      _
    // Predicated region
    $region18: #{tpu_custom_call.1} parent=1 // pred_check
      _
    $region19: #{tpu_custom_call.1} parent=1 // pred_check_branch
      %62 = sbr.rel (0) target = $region21
    $region20: #{tpu_custom_call.1} parent=1 // pred_region
      %64 = vsyncadd [#allocation9], 0
      %s65 = sshll.u32 %s4, 4
      %s66 = int_to_ptr.hbm [resolvable:$true] %s65
      %s67 = sshll.u32 [#allocation8], 4
      %s68 = int_to_ptr.vmem [resolvable:$true] %s67
      %73 = dma.hbm_to_vmem [thread:$0]  %s66, 256, %s68, [#allocation9], 64, 64, 4
    $region21: #{tpu_custom_call.1} parent=1 // pred_fallthru
      _
    // Predicated region
    $region22: #{tpu_custom_call.1} parent=1 // pred_check
      _
    $region23: #{tpu_custom_call.1} parent=1 // pred_check_branch
      %75 = sbr.rel (0) target = $region25
    $region24: #{tpu_custom_call.1} parent=1 // pred_region
      _
    $region25: #{tpu_custom_call.1} parent=1 // pred_fallthru
      _
    // Predicated region
    $region26: #{tpu_custom_call.1} parent=1 // pred_check
      _
    $region27: #{tpu_custom_call.1} parent=1 // pred_check_branch
      %77 = sbr.rel (0) target = $region29
    $region28: #{tpu_custom_call.1} parent=1 // pred_region
      %79 = vsyncadd [#allocation9], 0
      %s80 = sshll.u32 %s6, 4
      %s81 = int_to_ptr.hbm [resolvable:$true] %s80
      %s82 = sshll.u32 [#allocation10], 4
      %s83 = int_to_ptr.vmem [resolvable:$true] %s82
      %88 = dma.hbm_to_vmem [thread:$0]  %s81, 256, %s83, [#allocation9], 64, 64, 4
    $region29: #{tpu_custom_call.1} parent=1 // pred_fallthru
      _
    // Predicated region
    $region30: #{tpu_custom_call.1} parent=1 // pred_check
      _
    $region31: #{tpu_custom_call.1} parent=1 // pred_check_branch
      %90 = sbr.rel (0) target = $region33
    $region32: #{tpu_custom_call.1} parent=1 // pred_region
      _
    $region33: #{tpu_custom_call.1} parent=1 // pred_fallthru
      _
    // Predicated region
    $region34: #{tpu_custom_call.1} parent=1 // pred_check
      _
    $region35: #{tpu_custom_call.1} parent=1 // pred_check_branch
      %92 = sbr.rel (0) target = $region37
    $region36: #{tpu_custom_call.1} parent=1 // pred_region
      %94 = vsyncadd [#allocation12], 0
      %s95 = sshll.u32 %s8, 4
      %s96 = int_to_ptr.hbm [resolvable:$true] %s95
      %s97 = sshll.u32 [#allocation11], 4
      %s98 = int_to_ptr.vmem [resolvable:$true] %s97
      %103 = dma.hbm_to_vmem [thread:$0]  %s96, 256, %s98, [#allocation12], 64, 64, 4
    $region37: #{tpu_custom_call.1} parent=1 // pred_fallthru
      _
    // Predicated region
    $region38: #{tpu_custom_call.1} parent=1 // pred_check
      _
    $region39: #{tpu_custom_call.1} parent=1 // pred_check_branch
      %105 = sbr.rel (0) target = $region41
    $region40: #{tpu_custom_call.1} parent=1 // pred_region
      _
    $region41: #{tpu_custom_call.1} parent=1 // pred_fallthru
      _
    // Predicated region
    $region42: #{tpu_custom_call.1} parent=1 // pred_check
      _
    $region43: #{tpu_custom_call.1} parent=1 // pred_check_branch
      %107 = sbr.rel (0) target = $region45
    $region44: #{tpu_custom_call.1} parent=1 // pred_region
      %109 = dma.done [#allocation3], 256
    $region45: #{tpu_custom_call.1} parent=1 // pred_fallthru
      _
    // Predicated region
    $region46: #{tpu_custom_call.1} parent=1 // pred_check
      _
    $region47: #{tpu_custom_call.1} parent=1 // pred_check_branch
      %111 = sbr.rel (0) target = $region49
    $region48: #{tpu_custom_call.1} parent=1 // pred_region
      %113 = dma.done [#allocation6], 256
    $region49: #{tpu_custom_call.1} parent=1 // pred_fallthru
      _
    // Predicated region
    $region50: #{tpu_custom_call.1} parent=1 // pred_check
      _
    $region51: #{tpu_custom_call.1} parent=1 // pred_check_branch
      %115 = sbr.rel (0) target = $region53
    $region52: #{tpu_custom_call.1} parent=1 // pred_region
      %117 = dma.done [#allocation6], 256
    $region53: #{tpu_custom_call.1} parent=1 // pred_fallthru
      _
    // Predicated region
    $region54: #{tpu_custom_call.1} parent=1 // pred_check
      _
    $region55: #{tpu_custom_call.1} parent=1 // pred_check_branch
      %119 = sbr.rel (0) target = $region57
    $region56: #{tpu_custom_call.1} parent=1 // pred_region
      %121 = dma.done [#allocation9], 256
    $region57: #{tpu_custom_call.1} parent=1 // pred_fallthru
      _
    // Predicated region
    $region58: #{tpu_custom_call.1} parent=1 // pred_check
      _
    $region59: #{tpu_custom_call.1} parent=1 // pred_check_branch
      %123 = sbr.rel (0) target = $region61
    $region60: #{tpu_custom_call.1} parent=1 // pred_region
      %125 = dma.done [#allocation9], 256
    $region61: #{tpu_custom_call.1} parent=1 // pred_fallthru
      _
    // Predicated region
    $region62: #{tpu_custom_call.1} parent=1 // pred_check
      _
    $region63: #{tpu_custom_call.1} parent=1 // pred_check_branch
      %127 = sbr.rel (0) target = $region65
    $region64: #{tpu_custom_call.1} parent=1 // pred_region
      %129 = dma.done [#allocation12], 256
    $region65: #{tpu_custom_call.1} parent=1 // pred_fallthru
      _
    %v131 = vld [vmem:[#allocation2] sm:$0xff]
    %v132 = vld [vmem:[#allocation2 + $0x8] sm:$0xff]
    %v133 = vpack.c.bf16 %v132, %v131
    %v134 = vld [vmem:[#allocation5] sm:$0xff]
    %v135 = vld [vmem:[#allocation5 + $0x8] sm:$0xff]
    %v136 = vpack.c.bf16 %v135, %v134
    %v137 = vld [vmem:[#allocation7] sm:$0xf]
    %v138 = vld [vmem:[#allocation7 + $0x4] sm:$0xf]
    %v139 = vld [vmem:[#allocation7 + $0x8] sm:$0xf]
    %v140 = vld [vmem:[#allocation7 + $0xc] sm:$0xf]
    %v141 = vld [vmem:[%s3] sm:$0x1]
    %v143 = vperm.slane %v141, 0
    %v149 = vunpack.c.l.b16 %v137
    %v150 = vunpack.c.l.b16 %v138
    %v151 = vunpack.c.l.b16 %v139
    %v152 = vunpack.c.l.b16 %v140
    %v153 = vpack.c.b16 %v150, %v149
    %v154 = vpack.c.b16 %v152, %v151
    %vm157 = vcmask 261120
    %v159 = vsel %vm157, %v133, 0
    %161 = vmatpush.bf16.msra.mxu0 0
    %162 = vmatpush.bf16.msra.mxu0 0
    %163 = vmatpush.bf16.msra.mxu0 0
    %164 = vmatpush.bf16.msra.mxu0 0
    %165 = vmatpush.bf16.msra.mxu0 0
    %166 = vmatpush.bf16.msra.mxu0 0
    %167 = vmatpush.bf16.msra.mxu0 %v154
    %168 = vmatpush.bf16.msra.mxu0 %v153
    %169 = vmatmul.bf16.gmra.mxu0 %v159
    %v170 = vpop.f32.mrf.mxu0
    %v171 = vadd.f32 %v143, %v170
    %v172 = vpop.f32.mrf.mxu0
    %v173 = vadd.f32 %v143, %v172
    %174 = vdwg.mxu0
    %v175 = vld [vmem:[#allocation8] sm:$0xf]
    %v176 = vld [vmem:[#allocation8 + $0x4] sm:$0xf]
    %v177 = vld [vmem:[#allocation8 + $0x8] sm:$0xf]
    %v178 = vld [vmem:[#allocation8 + $0xc] sm:$0xf]
    %v179 = vld [vmem:[%s5] sm:$0x1]
    %v181 = vperm.slane %v179, 0
    %v187 = vunpack.c.l.b16 %v175
    %v188 = vunpack.c.l.b16 %v176
    %v189 = vunpack.c.l.b16 %v177
    %v190 = vunpack.c.l.b16 %v178
    %v191 = vpack.c.b16 %v188, %v187
    %v192 = vpack.c.b16 %v190, %v189
    %v196 = vsel %vm157, %v136, 0
    %198 = vmatpush.bf16.msra.mxu0 0
    %199 = vmatpush.bf16.msra.mxu0 0
    %200 = vmatpush.bf16.msra.mxu0 0
    %201 = vmatpush.bf16.msra.mxu0 0
    %202 = vmatpush.bf16.msra.mxu0 0
    %203 = vmatpush.bf16.msra.mxu0 0
    %204 = vmatpush.bf16.msra.mxu0 %v192
    %205 = vmatpush.bf16.msra.mxu0 %v191
    %206 = vmatmul.bf16.gmra.mxu0 %v196
    %v207 = vpop.f32.mrf.mxu0
    %v208 = vadd.f32 %v181, %v207
    %v209 = vpop.f32.mrf.mxu0
    %v210 = vadd.f32 %v181, %v209
    %211 = vdwg.mxu0
    %v212 = vld [vmem:[#allocation10] sm:$0xf]
    %v213 = vld [vmem:[#allocation10 + $0x4] sm:$0xf]
    %v214 = vld [vmem:[#allocation10 + $0x8] sm:$0xf]
    %v215 = vld [vmem:[#allocation10 + $0xc] sm:$0xf]
    %v216 = vld [vmem:[%s7] sm:$0x1]
    %v218 = vperm.slane %v216, 0
    %v224 = vunpack.c.l.b16 %v212
    %v225 = vunpack.c.l.b16 %v213
    %v226 = vunpack.c.l.b16 %v214
    %v227 = vunpack.c.l.b16 %v215
    %v228 = vpack.c.b16 %v225, %v224
    %v229 = vpack.c.b16 %v227, %v226
    %232 = vmatpush.bf16.msra.mxu0 0
    %233 = vmatpush.bf16.msra.mxu0 0
    %234 = vmatpush.bf16.msra.mxu0 0
    %235 = vmatpush.bf16.msra.mxu0 0
    %236 = vmatpush.bf16.msra.mxu0 0
    %237 = vmatpush.bf16.msra.mxu0 0
    %238 = vmatpush.bf16.msra.mxu0 %v229
    %239 = vmatpush.bf16.msra.mxu0 %v228
    %240 = vmatmul.bf16.gmra.mxu0 %v196
    %v241 = vpop.f32.mrf.mxu0
    %v242 = vadd.f32 %v218, %v241
    %v243 = vpop.f32.mrf.mxu0
    %v244 = vadd.f32 %v218, %v243
    %245 = vdwg.mxu0
    %v246 = vpack.c.bf16 %v171, %v171
    %v247 = vpack.c.bf16 %v173, %v173
    %v248 = vpack.c.bf16 %v208, %v208
    %v249 = vpack.c.bf16 %v210, %v210
    %v250 = vpack.c.bf16 %v242, %v242
    %v251 = vpack.c.bf16 %v244, %v244
    %vm252 = vcmask 64512
    %v254 = vsel %vm252, %v246, 0
    %v257 = vsel %vm252, %v248, 0
    %259 = vmatpush.bf16.xpose.msra.mxu0 0
    %260 = vmatpush.bf16.xpose.msra.mxu0 0
    %261 = vmatpush.bf16.xpose.msra.mxu0 0
    %262 = vmatpush.bf16.xpose.msra.mxu0 0
    %263 = vmatpush.bf16.xpose.msra.mxu0 0
    %264 = vmatpush.bf16.xpose.msra.mxu0 0
    %265 = vmatpush.bf16.xpose.msra.mxu0 0
    %266 = vmatpush.bf16.xpose.msra.mxu0 %v257
    %267 = vmatmul.bf16.gmra.mxu0 %v254
    %v268 = vpop.f32.mrf.mxu0
    %v269 = vadd.f32 0.0, %v268
    %v270 = vpop.f32.mrf.mxu0
    %271 = vdwg.mxu0
    %v273 = vsel %vm252, %v247, 0
    %v276 = vsel %vm252, %v249, 0
    %278 = vmatpush.bf16.xpose.msra.mxu0 0
    %279 = vmatpush.bf16.xpose.msra.mxu0 0
    %280 = vmatpush.bf16.xpose.msra.mxu0 0
    %281 = vmatpush.bf16.xpose.msra.mxu0 0
    %282 = vmatpush.bf16.xpose.msra.mxu0 0
    %283 = vmatpush.bf16.xpose.msra.mxu0 0
    %284 = vmatpush.bf16.xpose.msra.mxu0 0
    %285 = vmatpush.bf16.xpose.msra.mxu0 %v276
    %286 = vmatmul.bf16.gmra.mxu0 %v273
    %v287 = vpop.f32.mrf.mxu0
    %v288 = vadd.f32 0.0, %v287
    %v289 = vpop.f32.mrf.mxu0
    %290 = vdwg.mxu0
    %v291 = vsel %vm252, %v269, -inf
    %292 = vmax.xlane.f32.xlu0 %v291
    %v293 = vpop.xlane.xlu0 %292
    %v294 = vsel %vm252, %v288, -inf
    %295 = vmax.xlane.f32.xlu0 %v294
    %v296 = vpop.xlane.xlu0 %295
    %v297 = vsub.f32 %v269, %v293
    %v298 = vsub.f32 %v288, %v296
    %v299 = vmul.f32 %v297, 1.442695
    %v300 = vpow.pop %v299
    %v301 = vmul.f32 %v298, 1.442695
    %v302 = vpow.pop %v301
    %v303 = vsel %vm252, %v300, 0.0
    %304 = vadd.xlane.f32.xlu0 %v303
    %v305 = vpop.xlane.xlu0 %304
    %v306 = vsel %vm252, %v302, 0.0
    %307 = vadd.xlane.f32.xlu0 %v306
    %v308 = vpop.xlane.xlu0 %307
    %v309 = vrcp.pop %v305
    %v310 = vrcp.pop %v308
    %v311 = vmul.f32 %v300, %v309
    %v312 = vmul.f32 %v302, %v310
    %v313 = vpack.c.bf16 %v311, %v311
    %v314 = vpack.c.bf16 %v312, %v312
    %v316 = vsel %vm252, %v313, 0
    %vm318 = vcmask 1043456
    %v320 = vsel %vm318, %v250, 0
    %322 = vmatpush.bf16.msra.mxu0 0
    %323 = vmatpush.bf16.msra.mxu0 0
    %324 = vmatpush.bf16.msra.mxu0 0
    %325 = vmatpush.bf16.msra.mxu0 0
    %326 = vmatpush.bf16.msra.mxu0 0
    %327 = vmatpush.bf16.msra.mxu0 0
    %328 = vmatpush.bf16.msra.mxu0 0
    %329 = vmatpush.bf16.msra.mxu0 %v320
    %330 = vmatmul.bf16.gmra.mxu0 %v316
    %v331 = vpop.f32.mrf.mxu0
    %v332 = vadd.f32 0.0, %v331
    %v333 = vpop.f32.mrf.mxu0
    %334 = vdwg.mxu0
    %v336 = vsel %vm252, %v314, 0
    %v339 = vsel %vm318, %v251, 0
    %341 = vmatpush.bf16.msra.mxu0 0
    %342 = vmatpush.bf16.msra.mxu0 0
    %343 = vmatpush.bf16.msra.mxu0 0
    %344 = vmatpush.bf16.msra.mxu0 0
    %345 = vmatpush.bf16.msra.mxu0 0
    %346 = vmatpush.bf16.msra.mxu0 0
    %347 = vmatpush.bf16.msra.mxu0 0
    %348 = vmatpush.bf16.msra.mxu0 %v339
    %349 = vmatmul.bf16.gmra.mxu0 %v336
    %v350 = vpop.f32.mrf.mxu0
    %v351 = vadd.f32 0.0, %v350
    %v352 = vpop.f32.mrf.mxu0
    %353 = vdwg.mxu0
    %v354 = vpack.c.bf16 %v351, %v332
    %v355 = vld [vmem:[#allocation11] sm:$0xf]
    %v357 = vunpack.c.l.b16 %v246
    %v358 = vpack.c.b16 %v357, %v357
    %359 = vrot.lane.b32.xlu0 %v358, 120
    %v360 = vpop.permute.xlu0 %359
    %v362 = vunpack.c.l.b16 %v248
    %v363 = vpack.c.b16 %v362, %v362
    %364 = vrot.lane.b32.xlu0 %v363, 120
    %v365 = vpop.permute.xlu0 %364
    %v367 = vsel %vm252, %v360, 0
    %v370 = vsel %vm252, %v365, 0
    %372 = vmatpush.bf16.xpose.msra.mxu0 0
    %373 = vmatpush.bf16.xpose.msra.mxu0 0
    %374 = vmatpush.bf16.xpose.msra.mxu0 0
    %375 = vmatpush.bf16.xpose.msra.mxu0 0
    %376 = vmatpush.bf16.xpose.msra.mxu0 0
    %377 = vmatpush.bf16.xpose.msra.mxu0 0
    %378 = vmatpush.bf16.xpose.msra.mxu0 0
    %379 = vmatpush.bf16.xpose.msra.mxu0 %v370
    %380 = vmatmul.bf16.gmra.mxu0 %v367
    %v381 = vpop.f32.mrf.mxu0
    %v382 = vadd.f32 0.0, %v381
    %v383 = vpop.f32.mrf.mxu0
    %384 = vdwg.mxu0
    %v386 = vunpack.c.l.b16 %v247
    %v387 = vpack.c.b16 %v386, %v386
    %388 = vrot.lane.b32.xlu0 %v387, 120
    %v389 = vpop.permute.xlu0 %388
    %v391 = vunpack.c.l.b16 %v249
    %v392 = vpack.c.b16 %v391, %v391
    %393 = vrot.lane.b32.xlu0 %v392, 120
    %v394 = vpop.permute.xlu0 %393
    %v396 = vsel %vm252, %v389, 0
    %v399 = vsel %vm252, %v394, 0
    %401 = vmatpush.bf16.xpose.msra.mxu0 0
    %402 = vmatpush.bf16.xpose.msra.mxu0 0
    %403 = vmatpush.bf16.xpose.msra.mxu0 0
    %404 = vmatpush.bf16.xpose.msra.mxu0 0
    %405 = vmatpush.bf16.xpose.msra.mxu0 0
    %406 = vmatpush.bf16.xpose.msra.mxu0 0
    %407 = vmatpush.bf16.xpose.msra.mxu0 0
    %408 = vmatpush.bf16.xpose.msra.mxu0 %v399
    %409 = vmatmul.bf16.gmra.mxu0 %v396
    %v410 = vpop.f32.mrf.mxu0
    %v411 = vadd.f32 0.0, %v410
    %v412 = vpop.f32.mrf.mxu0
    %413 = vdwg.mxu0
    %v414 = vsel %vm252, %v382, -inf
    %415 = vmax.xlane.f32.xlu0 %v414
    %v416 = vpop.xlane.xlu0 %415
    %v417 = vsel %vm252, %v411, -inf
    %418 = vmax.xlane.f32.xlu0 %v417
    %v419 = vpop.xlane.xlu0 %418
    %v420 = vsub.f32 %v382, %v416
    %v421 = vsub.f32 %v411, %v419
    %v422 = vmul.f32 %v420, 1.442695
    %v423 = vpow.pop %v422
    %v424 = vmul.f32 %v421, 1.442695
    %v425 = vpow.pop %v424
    %v426 = vsel %vm252, %v423, 0.0
    %427 = vadd.xlane.f32.xlu0 %v426
    %v428 = vpop.xlane.xlu0 %427
    %v429 = vsel %vm252, %v425, 0.0
    %430 = vadd.xlane.f32.xlu0 %v429
    %v431 = vpop.xlane.xlu0 %430
    %v432 = vrcp.pop %v428
    %v433 = vrcp.pop %v431
    %v434 = vmul.f32 %v423, %v432
    %v435 = vmul.f32 %v425, %v433
    %v436 = vpack.c.bf16 %v434, %v434
    %v437 = vpack.c.bf16 %v435, %v435
    %v439 = vunpack.c.l.b16 %v250
    %v440 = vpack.c.b16 %v439, %v439
    %441 = vrot.lane.b32.xlu0 %v440, 120
    %v442 = vpop.permute.xlu0 %441
    %v444 = vsel %vm252, %v436, 0
    %v447 = vsel %vm318, %v442, 0
    %449 = vmatpush.bf16.msra.mxu0 0
    %450 = vmatpush.bf16.msra.mxu0 0
    %451 = vmatpush.bf16.msra.mxu0 0
    %452 = vmatpush.bf16.msra.mxu0 0
    %453 = vmatpush.bf16.msra.mxu0 0
    %454 = vmatpush.bf16.msra.mxu0 0
    %455 = vmatpush.bf16.msra.mxu0 0
    %456 = vmatpush.bf16.msra.mxu0 %v447
    %457 = vmatmul.bf16.gmra.mxu0 %v444
    %v458 = vpop.f32.mrf.mxu0
    %v459 = vadd.f32 0.0, %v458
    %v460 = vpop.f32.mrf.mxu0
    %461 = vdwg.mxu0
    %v463 = vunpack.c.l.b16 %v251
    %v464 = vpack.c.b16 %v463, %v463
    %465 = vrot.lane.b32.xlu0 %v464, 120
    %v466 = vpop.permute.xlu0 %465
    %v468 = vsel %vm252, %v437, 0
    %v471 = vsel %vm318, %v466, 0
    %473 = vmatpush.bf16.msra.mxu0 0
    %474 = vmatpush.bf16.msra.mxu0 0
    %475 = vmatpush.bf16.msra.mxu0 0
    %476 = vmatpush.bf16.msra.mxu0 0
    %477 = vmatpush.bf16.msra.mxu0 0
    %478 = vmatpush.bf16.msra.mxu0 0
    %479 = vmatpush.bf16.msra.mxu0 0
    %480 = vmatpush.bf16.msra.mxu0 %v471
    %481 = vmatmul.bf16.gmra.mxu0 %v468
    %v482 = vpop.f32.mrf.mxu0
    %v483 = vadd.f32 0.0, %v482
    %v484 = vpop.f32.mrf.mxu0
    %485 = vdwg.mxu0
    %v486 = vpack.c.bf16 %v483, %v459
    %v487 = vld [vmem:[#allocation11 + $0x4] sm:$0xf]
    %v489 = vsel %vm252, %v486, 0
    %v492 = vsel %vm318, %v487, 0
    %494 = vmatpush.bf16.msra.mxu0 0
    %495 = vmatpush.bf16.msra.mxu0 0
    %496 = vmatpush.bf16.msra.mxu0 0
    %497 = vmatpush.bf16.msra.mxu0 0
    %498 = vmatpush.bf16.msra.mxu0 0
    %499 = vmatpush.bf16.msra.mxu0 0
    %500 = vmatpush.bf16.msra.mxu0 0
    %501 = vmatpush.bf16.msra.mxu0 %v492
    %502 = vmatmul.bf16.gmra.mxu0 %v489
    %v503 = vpop.f32.mrf.mxu0
    %v504 = vadd.f32 0.0, %v503
    %v505 = vpop.f32.mrf.mxu0
    %v506 = vadd.f32 0.0, %v505
    %507 = vdwg.mxu0
    %v509 = vsel %vm252, %v354, 0
    %v512 = vsel %vm318, %v355, 0
    %514 = vmatpush.bf16.msra.mxu0 0
    %515 = vmatpush.bf16.msra.mxu0 0
    %516 = vmatpush.bf16.msra.mxu0 0
    %517 = vmatpush.bf16.msra.mxu0 0
    %518 = vmatpush.bf16.msra.mxu0 0
    %519 = vmatpush.bf16.msra.mxu0 0
    %520 = vmatpush.bf16.msra.mxu0 0
    %521 = vmatpush.bf16.msra.mxu0 %v512
    %522 = vmatmul.bf16.gmra.mxu0 %v509
    %v523 = vpop.f32.mrf.mxu0
    %v524 = vadd.f32 %v504, %v523
    %v525 = vpop.f32.mrf.mxu0
    %v526 = vadd.f32 %v506, %v525
    %527 = vdwg.mxu0
    %528 = vrot.lane.b32.xlu0 %v358, 112
    %v529 = vpop.permute.xlu0 %528
    %530 = vrot.lane.b32.xlu0 %v363, 112
    %v531 = vpop.permute.xlu0 %530
    %v533 = vsel %vm252, %v529, 0
    %v536 = vsel %vm252, %v531, 0
    %538 = vmatpush.bf16.xpose.msra.mxu0 0
    %539 = vmatpush.bf16.xpose.msra.mxu0 0
    %540 = vmatpush.bf16.xpose.msra.mxu0 0
    %541 = vmatpush.bf16.xpose.msra.mxu0 0
    %542 = vmatpush.bf16.xpose.msra.mxu0 0
    %543 = vmatpush.bf16.xpose.msra.mxu0 0
    %544 = vmatpush.bf16.xpose.msra.mxu0 0
    %545 = vmatpush.bf16.xpose.msra.mxu0 %v536
    %546 = vmatmul.bf16.gmra.mxu0 %v533
    %v547 = vpop.f32.mrf.mxu0
    %v548 = vadd.f32 0.0, %v547
    %v549 = vpop.f32.mrf.mxu0
    %550 = vdwg.mxu0
    %551 = vrot.lane.b32.xlu0 %v387, 112
    %v552 = vpop.permute.xlu0 %551
    %553 = vrot.lane.b32.xlu0 %v392, 112
    %v554 = vpop.permute.xlu0 %553
    %v556 = vsel %vm252, %v552, 0
    %v559 = vsel %vm252, %v554, 0
    %561 = vmatpush.bf16.xpose.msra.mxu0 0
    %562 = vmatpush.bf16.xpose.msra.mxu0 0
    %563 = vmatpush.bf16.xpose.msra.mxu0 0
    %564 = vmatpush.bf16.xpose.msra.mxu0 0
    %565 = vmatpush.bf16.xpose.msra.mxu0 0
    %566 = vmatpush.bf16.xpose.msra.mxu0 0
    %567 = vmatpush.bf16.xpose.msra.mxu0 0
    %568 = vmatpush.bf16.xpose.msra.mxu0 %v559
    %569 = vmatmul.bf16.gmra.mxu0 %v556
    %v570 = vpop.f32.mrf.mxu0
    %v571 = vadd.f32 0.0, %v570
    %v572 = vpop.f32.mrf.mxu0
    %573 = vdwg.mxu0
    %v574 = vsel %vm252, %v548, -inf
    %575 = vmax.xlane.f32.xlu0 %v574
    %v576 = vpop.xlane.xlu0 %575
    %v577 = vsel %vm252, %v571, -inf
    %578 = vmax.xlane.f32.xlu0 %v577
    %v579 = vpop.xlane.xlu0 %578
    %v580 = vsub.f32 %v548, %v576
    %v581 = vsub.f32 %v571, %v579
    %v582 = vmul.f32 %v580, 1.442695
    %v583 = vpow.pop %v582
    %v584 = vmul.f32 %v581, 1.442695
    %v585 = vpow.pop %v584
    %v586 = vsel %vm252, %v583, 0.0
    %587 = vadd.xlane.f32.xlu0 %v586
    %v588 = vpop.xlane.xlu0 %587
    %v589 = vsel %vm252, %v585, 0.0
    %590 = vadd.xlane.f32.xlu0 %v589
    %v591 = vpop.xlane.xlu0 %590
    %v592 = vrcp.pop %v588
    %v593 = vrcp.pop %v591
    %v594 = vmul.f32 %v583, %v592
    %v595 = vmul.f32 %v585, %v593
    %v596 = vpack.c.bf16 %v594, %v594
    %v597 = vpack.c.bf16 %v595, %v595
    %598 = vrot.lane.b32.xlu0 %v440, 112
    %v599 = vpop.permute.xlu0 %598
    %v601 = vsel %vm252, %v596, 0
    %v604 = vsel %vm318, %v599, 0
    %606 = vmatpush.bf16.msra.mxu0 0
    %607 = vmatpush.bf16.msra.mxu0 0
    %608 = vmatpush.bf16.msra.mxu0 0
    %609 = vmatpush.bf16.msra.mxu0 0
    %610 = vmatpush.bf16.msra.mxu0 0
    %611 = vmatpush.bf16.msra.mxu0 0
    %612 = vmatpush.bf16.msra.mxu0 0
    %613 = vmatpush.bf16.msra.mxu0 %v604
    %614 = vmatmul.bf16.gmra.mxu0 %v601
    %v615 = vpop.f32.mrf.mxu0
    %v616 = vadd.f32 0.0, %v615
    %v617 = vpop.f32.mrf.mxu0
    %618 = vdwg.mxu0
    %619 = vrot.lane.b32.xlu0 %v464, 112
    %v620 = vpop.permute.xlu0 %619
    %v622 = vsel %vm252, %v597, 0
    %v625 = vsel %vm318, %v620, 0
    %627 = vmatpush.bf16.msra.mxu0 0
    %628 = vmatpush.bf16.msra.mxu0 0
    %629 = vmatpush.bf16.msra.mxu0 0
    %630 = vmatpush.bf16.msra.mxu0 0
    %631 = vmatpush.bf16.msra.mxu0 0
    %632 = vmatpush.bf16.msra.mxu0 0
    %633 = vmatpush.bf16.msra.mxu0 0
    %634 = vmatpush.bf16.msra.mxu0 %v625
    %635 = vmatmul.bf16.gmra.mxu0 %v622
    %v636 = vpop.f32.mrf.mxu0
    %v637 = vadd.f32 0.0, %v636
    %v638 = vpop.f32.mrf.mxu0
    %639 = vdwg.mxu0
    %v640 = vpack.c.bf16 %v637, %v616
    %v641 = vld [vmem:[#allocation11 + $0x8] sm:$0xf]
    %v643 = vsel %vm252, %v640, 0
    %v646 = vsel %vm318, %v641, 0
    %648 = vmatpush.bf16.msra.mxu0 0
    %649 = vmatpush.bf16.msra.mxu0 0
    %650 = vmatpush.bf16.msra.mxu0 0
    %651 = vmatpush.bf16.msra.mxu0 0
    %652 = vmatpush.bf16.msra.mxu0 0
    %653 = vmatpush.bf16.msra.mxu0 0
    %654 = vmatpush.bf16.msra.mxu0 0
    %655 = vmatpush.bf16.msra.mxu0 %v646
    %656 = vmatmul.bf16.gmra.mxu0 %v643
    %v657 = vpop.f32.mrf.mxu0
    %v658 = vadd.f32 0.0, %v657
    %v659 = vpop.f32.mrf.mxu0
    %v660 = vadd.f32 0.0, %v659
    %661 = vdwg.mxu0
    %v662 = vadd.f32 %v524, %v658
    %v663 = vadd.f32 %v526, %v660
    %664 = vrot.lane.b32.xlu0 %v358, 104
    %v665 = vpop.permute.xlu0 %664
    %666 = vrot.lane.b32.xlu0 %v363, 104
    %v667 = vpop.permute.xlu0 %666
    %v669 = vsel %vm252, %v665, 0
    %v672 = vsel %vm252, %v667, 0
    %674 = vmatpush.bf16.xpose.msra.mxu0 0
    %675 = vmatpush.bf16.xpose.msra.mxu0 0
    %676 = vmatpush.bf16.xpose.msra.mxu0 0
    %677 = vmatpush.bf16.xpose.msra.mxu0 0
    %678 = vmatpush.bf16.xpose.msra.mxu0 0
    %679 = vmatpush.bf16.xpose.msra.mxu0 0
    %680 = vmatpush.bf16.xpose.msra.mxu0 0
    %681 = vmatpush.bf16.xpose.msra.mxu0 %v672
    %682 = vmatmul.bf16.gmra.mxu0 %v669
    %v683 = vpop.f32.mrf.mxu0
    %v684 = vadd.f32 0.0, %v683
    %v685 = vpop.f32.mrf.mxu0
    %686 = vdwg.mxu0
    %687 = vrot.lane.b32.xlu0 %v387, 104
    %v688 = vpop.permute.xlu0 %687
    %689 = vrot.lane.b32.xlu0 %v392, 104
    %v690 = vpop.permute.xlu0 %689
    %v692 = vsel %vm252, %v688, 0
    %v695 = vsel %vm252, %v690, 0
    %697 = vmatpush.bf16.xpose.msra.mxu0 0
    %698 = vmatpush.bf16.xpose.msra.mxu0 0
    %699 = vmatpush.bf16.xpose.msra.mxu0 0
    %700 = vmatpush.bf16.xpose.msra.mxu0 0
    %701 = vmatpush.bf16.xpose.msra.mxu0 0
    %702 = vmatpush.bf16.xpose.msra.mxu0 0
    %703 = vmatpush.bf16.xpose.msra.mxu0 0
    %704 = vmatpush.bf16.xpose.msra.mxu0 %v695
    %705 = vmatmul.bf16.gmra.mxu0 %v692
    %v706 = vpop.f32.mrf.mxu0
    %v707 = vadd.f32 0.0, %v706
    %v708 = vpop.f32.mrf.mxu0
    %709 = vdwg.mxu0
    %v710 = vsel %vm252, %v684, -inf
    %711 = vmax.xlane.f32.xlu0 %v710
    %v712 = vpop.xlane.xlu0 %711
    %v713 = vsel %vm252, %v707, -inf
    %714 = vmax.xlane.f32.xlu0 %v713
    %v715 = vpop.xlane.xlu0 %714
    %v716 = vsub.f32 %v684, %v712
    %v717 = vsub.f32 %v707, %v715
    %v718 = vmul.f32 %v716, 1.442695
    %v719 = vpow.pop %v718
    %v720 = vmul.f32 %v717, 1.442695
    %v721 = vpow.pop %v720
    %v722 = vsel %vm252, %v719, 0.0
    %723 = vadd.xlane.f32.xlu0 %v722
    %v724 = vpop.xlane.xlu0 %723
    %v725 = vsel %vm252, %v721, 0.0
    %726 = vadd.xlane.f32.xlu0 %v725
    %v727 = vpop.xlane.xlu0 %726
    %v728 = vrcp.pop %v724
    %v729 = vrcp.pop %v727
    %v730 = vmul.f32 %v719, %v728
    %v731 = vmul.f32 %v721, %v729
    %v732 = vpack.c.bf16 %v730, %v730
    %v733 = vpack.c.bf16 %v731, %v731
    %734 = vrot.lane.b32.xlu0 %v440, 104
    %v735 = vpop.permute.xlu0 %734
    %v737 = vsel %vm252, %v732, 0
    %v740 = vsel %vm318, %v735, 0
    %742 = vmatpush.bf16.msra.mxu0 0
    %743 = vmatpush.bf16.msra.mxu0 0
    %744 = vmatpush.bf16.msra.mxu0 0
    %745 = vmatpush.bf16.msra.mxu0 0
    %746 = vmatpush.bf16.msra.mxu0 0
    %747 = vmatpush.bf16.msra.mxu0 0
    %748 = vmatpush.bf16.msra.mxu0 0
    %749 = vmatpush.bf16.msra.mxu0 %v740
    %750 = vmatmul.bf16.gmra.mxu0 %v737
    %v751 = vpop.f32.mrf.mxu0
    %v752 = vadd.f32 0.0, %v751
    %v753 = vpop.f32.mrf.mxu0
    %754 = vdwg.mxu0
    %755 = vrot.lane.b32.xlu0 %v464, 104
    %v756 = vpop.permute.xlu0 %755
    %v758 = vsel %vm252, %v733, 0
    %v761 = vsel %vm318, %v756, 0
    %763 = vmatpush.bf16.msra.mxu0 0
    %764 = vmatpush.bf16.msra.mxu0 0
    %765 = vmatpush.bf16.msra.mxu0 0
    %766 = vmatpush.bf16.msra.mxu0 0
    %767 = vmatpush.bf16.msra.mxu0 0
    %768 = vmatpush.bf16.msra.mxu0 0
    %769 = vmatpush.bf16.msra.mxu0 0
    %770 = vmatpush.bf16.msra.mxu0 %v761
    %771 = vmatmul.bf16.gmra.mxu0 %v758
    %v772 = vpop.f32.mrf.mxu0
    %v773 = vadd.f32 0.0, %v772
    %v774 = vpop.f32.mrf.mxu0
    %775 = vdwg.mxu0
    %v776 = vpack.c.bf16 %v773, %v752
    %v777 = vld [vmem:[#allocation11 + $0xc] sm:$0xf]
    %v779 = vsel %vm252, %v776, 0
    %v782 = vsel %vm318, %v777, 0
    %784 = vmatpush.bf16.msra.mxu0 0
    %785 = vmatpush.bf16.msra.mxu0 0
    %786 = vmatpush.bf16.msra.mxu0 0
    %787 = vmatpush.bf16.msra.mxu0 0
    %788 = vmatpush.bf16.msra.mxu0 0
    %789 = vmatpush.bf16.msra.mxu0 0
    %790 = vmatpush.bf16.msra.mxu0 0
    %791 = vmatpush.bf16.msra.mxu0 %v782
    %792 = vmatmul.bf16.gmra.mxu0 %v779
    %v793 = vpop.f32.mrf.mxu0
    %v794 = vadd.f32 0.0, %v793
    %v795 = vpop.f32.mrf.mxu0
    %v796 = vadd.f32 0.0, %v795
    %797 = vdwg.mxu0
    %v798 = vadd.f32 %v662, %v794
    %v799 = vadd.f32 %v663, %v796
    %v800 = vld [vmem:[%s9] sm:$0x1]
    %v802 = vperm.slane %v800, 0
    %v804 = vadd.f32 %v798, %v802
    %v805 = vadd.f32 %v799, %v802
    %v808 = vrot.slane %v804, 1
    %v809 = vrot.slane %v805, 1
    %810 = vrot.lane.b32.xlu0 %v808, 32
    %v811 = vpop.permute.xlu0 %810
    %812 = vrot.lane.b32.xlu0 %v809, 32
    %v813 = vpop.permute.xlu0 %812
    %v816 = vrot.slane %v804, 2
    %v817 = vrot.slane %v805, 2
    %818 = vrot.lane.b32.xlu0 %v816, 64
    %v819 = vpop.permute.xlu0 %818
    %820 = vrot.lane.b32.xlu0 %v817, 64
    %v821 = vpop.permute.xlu0 %820
    %v824 = vrot.slane %v804, 3
    %v825 = vrot.slane %v805, 3
    %826 = vrot.lane.b32.xlu0 %v824, 96
    %v827 = vpop.permute.xlu0 %826
    %828 = vrot.lane.b32.xlu0 %v825, 96
    %v829 = vpop.permute.xlu0 %828
    %v832 = vrot.slane %v804, 4
    %v833 = vrot.slane %v805, 4
    %v836 = vrot.slane %v804, 5
    %v837 = vrot.slane %v805, 5
    %838 = vrot.lane.b32.xlu0 %v836, 32
    %v839 = vpop.permute.xlu0 %838
    %840 = vrot.lane.b32.xlu0 %v837, 32
    %v841 = vpop.permute.xlu0 %840
    %v844 = vrot.slane %v804, 6
    %v845 = vrot.slane %v805, 6
    %846 = vrot.lane.b32.xlu0 %v844, 64
    %v847 = vpop.permute.xlu0 %846
    %848 = vrot.lane.b32.xlu0 %v845, 64
    %v849 = vpop.permute.xlu0 %848
    %v852 = vrot.slane %v804, 7
    %v853 = vrot.slane %v805, 7
    %854 = vrot.lane.b32.xlu0 %v852, 96
    %v855 = vpop.permute.xlu0 %854
    %856 = vrot.lane.b32.xlu0 %v853, 96
    %v857 = vpop.permute.xlu0 %856
    %v860 = vsel %vm157, %v804, %v811
    %v861 = vsel %vm157, %v805, %v813
    %vm862 = vcmask 523264
    %v863 = vsel %vm862, %v860, %v819
    %v864 = vsel %vm862, %v861, %v821
    %vm865 = vcmask 785408
    %v866 = vsel %vm865, %v863, %v827
    %v867 = vsel %vm865, %v864, %v829
    %v868 = vsel %vm157, %v832, %v839
    %v869 = vsel %vm157, %v833, %v841
    %v870 = vsel %vm862, %v868, %v847
    %v871 = vsel %vm862, %v869, %v849
    %v872 = vsel %vm865, %v870, %v855
    %v873 = vsel %vm865, %v871, %v857
    %v878 = vrot.slane %v872, 6
    %v879 = vrot.slane %v873, 6
    %vm880 = vcmask 1041408
    %v881 = vsel %vm880, %v866, %v878
    %v882 = vsel %vm880, %v867, %v879
    %vm883 = vcmask 1044484
    %v884 = vsel %vm883, %v881, %v881
    %vm885 = vcmask 1046534
    %v886 = vsel %vm885, %v881, %v884
    %v887 = vrot.slane %v882, 7
    %vm888 = vcmask 1041409
    %v889 = vsel %vm888, %v887, %v886
    %vm890 = vcmask 1043459
    %v891 = vsel %vm890, %v887, %v889
    %vm892 = vcmask 1045509
    %v893 = vsel %vm892, %v887, %v891
    %vm894 = vcmask 1047559
    %v895 = vsel %vm894, %v887, %v893
    %897 = vst [vmem:[#allocation13] sm:$0xf] %v895
    // Predicated region
    $region66: #{tpu_custom_call.1} parent=1 // pred_check
      _
    $region67: #{tpu_custom_call.1} parent=1 // pred_check_branch
      %899 = sbr.rel (0) target = $region69
    $region68: #{tpu_custom_call.1} parent=1 // pred_region
      %901 = vsyncadd [#allocation4], 0
      %s903 = sshll.u32 [#allocation13], 4
      %s904 = int_to_ptr.vmem [resolvable:$true] %s903
      %s905 = sshll.u32 %s10, 4
      %s906 = int_to_ptr.hbm [resolvable:$true] %s905
      %908 = dma.vmem_to_hbm [thread:$0]  %s904, 64, %s906, [#allocation4]
    $region69: #{tpu_custom_call.1} parent=1 // pred_fallthru
      _
    // Predicated region
    $region70: #{tpu_custom_call.1} parent=1 // pred_check
      _
    $region71: #{tpu_custom_call.1} parent=1 // pred_check_branch
      %910 = sbr.rel (0) target = $region73
    $region72: #{tpu_custom_call.1} parent=1 // pred_region
      %912 = dma.done [#allocation4], 64
    $region73: #{tpu_custom_call.1} parent=1 // pred_fallthru
      _
    %913 = vsyncpa [#allocation3], 1
    %914 = vsyncpa [#allocation6], 1
    %915 = vsyncpa [#allocation9], 1
    %916 = vsyncpa [#allocation12], 1
    %917 = vsyncpa [#allocation4], 1

</llo_original>
